<compile_context>
chip_gen: v5e
topology: v5e:2x2
jax: 0.10.0
libtpu: 0.0.40
codegen_flags: <defaults>
</compile_context>

<pallas_src>
import math

import jax
import jax.numpy as jnp
from jax.experimental import pallas as pl
from jax.experimental.pallas import tpu as pltpu

NEURONS_P = 15   # hidden width from the reference module
IN_DIM = 3
OUT_DIM = 1
NUM_LAYERS = 4
FEAT_PAD = 16    # hidden feature dims zero-padded to 16 (2 f32 sublane groups)
IN_PAD = 8       # input features padded only to one f32 sublane group (3 -> 8)
CHUNK = 512      # in-kernel lane sub-chunk width (multiple of 128)


def _netp_kernel(x_ref, w_ref, b_ref, o_ref):
    # x_ref: (IN_PAD, TB) feature-major batch tile (rows >= IN_DIM are zero).
    # w_ref: (4, FEAT_PAD, FEAT_PAD) zero-padded weight slab, torch (out, in) layout.
    # b_ref: (4, FEAT_PAD, 1) zero-padded bias slab (broadcast along lanes).
    # o_ref: (1, TB) lane-dense output slab.

    # Hoist the tiny, VMEM-resident parameter loads out of the chunk loop.
    w1 = w_ref[0][:, :IN_PAD]    # (16, 8); padded cols 3..7 are already zero
    w2 = w_ref[1]
    w3 = w_ref[2]
    w4 = w_ref[3]
    b1 = b_ref[0]
    b2 = b_ref[1]
    b3 = b_ref[2]
    b4 = b_ref[3]

    tb = x_ref.shape[-1]
    # Independent 512-lane column chunks, Python-unrolled so the LLO scheduler
    # can overlap the MXU push of chunk j+1 with the EUP tanh of chunk j.
    for c in range(tb // CHUNK):
        sl = slice(c * CHUNK, (c + 1) * CHUNK)
        h = x_ref[:, sl]                                            # (8, CHUNK)
        # Default matmul precision already passes the 1e-4 check vs the f32
        # reference at K <= 16; use lax.Precision.HIGHEST only if stricter
        # parity with the torch f32 path is ever required.
        h = jnp.tanh(jnp.dot(w1, h, preferred_element_type=jnp.float32) + b1)
        h = jnp.tanh(jnp.dot(w2, h, preferred_element_type=jnp.float32) + b2)
        h = jnp.tanh(jnp.dot(w3, h, preferred_element_type=jnp.float32) + b3)
        y = jnp.dot(w4, h, preferred_element_type=jnp.float32) + b4
        o_ref[:, sl] = y[0:1, :]    # row 0 is the real (padded 15->1) output


def pack_netp_params(params):
    """Pack W1..W4 / b1..b4 (torch (out, in) layout) into zero-padded slabs.
    Call ONCE at init and pass the results to netp_forward — keeps the tiny
    dynamic-update-slice / zeros ops out of the per-call hot path."""
    wp = jnp.zeros((NUM_LAYERS, FEAT_PAD, FEAT_PAD), jnp.float32)
    bp = jnp.zeros((NUM_LAYERS, FEAT_PAD, 1), jnp.float32)
    for l in range(NUM_LAYERS):
        w = jnp.asarray(params[f"W{l + 1}"], jnp.float32)
        b = jnp.asarray(params[f"b{l + 1}"], jnp.float32)
        out_f, in_f = w.shape
        wp = wp.at[l, :out_f, :in_f].set(w)
        bp = bp.at[l, :out_f, 0].set(b)
    return wp, bp


def _round_up(n, m):
    return ((n + m - 1) // m) * m


def _choose_block(batch, target_steps=4, max_block=16384):
    """Batch-tile width: a handful of grid steps (amortizes ~0.35 us/step
    pipeline overhead; >=2 steps lets v7x megacore shard the grid), capped so
    double-buffered VMEM stays tiny even under v5e's 16 MiB scoped default."""
    block = _round_up(max(1, -(-batch // target_steps)), CHUNK)
    block = min(block, max_block)
    n_blocks = -(-batch // block)
    return block, n_blocks


@jax.jit
def netp_forward(x, wp, bp):
    """x: (B, 3) float32; wp/bp: packed slabs from pack_netp_params.
    Returns (B, 1) float32, matching the torch module."""
    B, F = x.shape
    assert F == IN_DIM

    block_b, n_blocks = _choose_block(B)
    B_pad = block_b * n_blocks

    # One wrapper-side transpose+pad to feature-major, only one f32 sublane
    # group of features (8 rows, not 16) -> half the input HBM stream.
    # (Further option: pass x in natural (B,3) layout and fold the transpose
    # into the first dot in-kernel, cutting input bytes to 12/point.)
    xT = jnp.pad(x.T.astype(jnp.float32),
                 ((0, IN_PAD - F), (0, B_pad - B)))     # (8, B_pad)

    out = pl.pallas_call(
        _netp_kernel,
        out_shape=jax.ShapeDtypeStruct((1, B_pad), jnp.float32),
        grid_spec=pltpu.PrefetchScalarGridSpec(
            num_scalar_prefetch=0,
            grid=(n_blocks,),
            in_specs=[
                # batch tile: features on sublanes, batch on lanes (lane-dense)
                pl.BlockSpec((IN_PAD, block_b), lambda i: (0, i)),
                # full weight / bias slabs, same block every step (VMEM resident)
                pl.BlockSpec((NUM_LAYERS, FEAT_PAD, FEAT_PAD), lambda i: (0, 0, 0)),
                pl.BlockSpec((NUM_LAYERS, FEAT_PAD, 1), lambda i: (0, 0, 0)),
            ],
            out_specs=pl.BlockSpec((1, block_b), lambda i: (0, i)),
        ),
        compiler_params=pltpu.CompilerParams(
            # batch tiles are independent -> shard across TensorCores on v7x
            dimension_semantics=("parallel",),
        ),
    )(xT, wp, bp)

    return out[:, :B].T    # (B, 1)


def init_netp_params(key):
    """Deterministic init mimicking torch.nn.Linear default
    (U[-1/sqrt(fan_in), 1/sqrt(fan_in)]). Weights kept in torch (out, in) layout."""
    dims = [(NEURONS_P, IN_DIM), (NEURONS_P, NEURONS_P),
            (NEURONS_P, NEURONS_P), (OUT_DIM, NEURONS_P)]
    params = {}
    keys = jax.random.split(key, 2 * len(dims))
    for idx, (fan_out, fan_in) in enumerate(dims):
        bound = 1.0 / math.sqrt(fan_in)
        w = jax.random.uniform(keys[2 * idx], (fan_out, fan_in),
                               minval=-bound, maxval=bound, dtype=jnp.float32)
        b = jax.random.uniform(keys[2 * idx + 1], (fan_out,),
                               minval=-bound, maxval=bound, dtype=jnp.float32)
        params[f"W{idx + 1}"] = w
        params[f"b{idx + 1}"] = b
    return params


def netp_reference(x, params):
    """Pure-JAX reference (torch.nn.Linear semantics: x @ W.T + b)."""
    h = jnp.tanh(x @ params["W1"].T + params["b1"])
    h = jnp.tanh(h @ params["W2"].T + params["b2"])
    h = jnp.tanh(h @ params["W3"].T + params["b3"])
    return h @ params["W4"].T + params["b4"]


if __name__ == "__main__":
    key = jax.random.PRNGKey(0)
    pkey, xkey = jax.random.split(key)

    params = init_netp_params(pkey)
    wp, bp = pack_netp_params(params)   # packed once, outside the hot path

    # Batch of 3-D collocation points (x, y, t) in [0, 1]^3.
    # 2048 points -> 4 x 512-lane tiles -> 4 parallel grid steps.
    B = 2048
    x = jax.random.uniform(xkey, (B, IN_DIM), dtype=jnp.float32)

    y = jax.block_until_ready(netp_forward(x, wp, bp))

    y_ref = netp_reference(x, params)
    assert y.shape == (B, OUT_DIM)
    max_err = float(jnp.max(jnp.abs(y - y_ref)))
    assert max_err < 1e-4, f"mismatch vs reference (max abs err {max_err})"

    print("KERNEL_OK")
</pallas_src>

<mosaic_0001>
module attributes {stable_mosaic.version = 11 : i64} {
  func.func @_netp_kernel(%arg0: i32, %arg1: memref<8x512xf32, #tpu.memory_space<vmem>>, %arg2: memref<4x16x16xf32, #tpu.memory_space<vmem>>, %arg3: memref<4x16x1xf32, #tpu.memory_space<vmem>>, %arg4: memref<1x512xf32, #tpu.memory_space<vmem>>) attributes {dimension_semantics = [#tpu.dimension_semantics<parallel>], iteration_bounds = array<i64: 4>, scalar_prefetch = 0 : i64, scratch_operands = 0 : i64, tpu.core_type = #tpu.core_type<tc>, window_params = [{transform_indices = @transform_0, window_bounds = array<i64: 8, 512>}, {pipeline_mode = #tpu.pipeline_mode<synchronous>, transform_indices = @transform_1, window_bounds = array<i64: 4, 16, 16>}, {pipeline_mode = #tpu.pipeline_mode<synchronous>, transform_indices = @transform_2, window_bounds = array<i64: 4, 16, 1>}, {transform_indices = @transform_3, window_bounds = array<i64: 1, 512>}]} {
    %c0 = arith.constant 0 : index
    %c0_0 = arith.constant 0 : index
    %c0_1 = arith.constant 0 : index
    %0 = vector.load %arg2[%c0, %c0_0, %c0_1] : memref<4x16x16xf32, #tpu.memory_space<vmem>>, vector<1x16x16xf32>
    %1 = vector.shape_cast %0 : vector<1x16x16xf32> to vector<16x16xf32>
    %2 = vector.extract_strided_slice %1 {offsets = [0, 0], sizes = [16, 8], strides = [1, 1]} : vector<16x16xf32> to vector<16x8xf32>
    %c1 = arith.constant 1 : index
    %c0_2 = arith.constant 0 : index
    %c0_3 = arith.constant 0 : index
    %3 = vector.load %arg2[%c1, %c0_2, %c0_3] : memref<4x16x16xf32, #tpu.memory_space<vmem>>, vector<1x16x16xf32>
    %4 = vector.shape_cast %3 : vector<1x16x16xf32> to vector<16x16xf32>
    %c2 = arith.constant 2 : index
    %c0_4 = arith.constant 0 : index
    %c0_5 = arith.constant 0 : index
    %5 = vector.load %arg2[%c2, %c0_4, %c0_5] : memref<4x16x16xf32, #tpu.memory_space<vmem>>, vector<1x16x16xf32>
    %6 = vector.shape_cast %5 : vector<1x16x16xf32> to vector<16x16xf32>
    %c3 = arith.constant 3 : index
    %c0_6 = arith.constant 0 : index
    %c0_7 = arith.constant 0 : index
    %7 = vector.load %arg2[%c3, %c0_6, %c0_7] : memref<4x16x16xf32, #tpu.memory_space<vmem>>, vector<1x16x16xf32>
    %8 = vector.shape_cast %7 : vector<1x16x16xf32> to vector<16x16xf32>
    %c0_8 = arith.constant 0 : index
    %c0_9 = arith.constant 0 : index
    %c0_10 = arith.constant 0 : index
    %9 = vector.load %arg3[%c0_8, %c0_9, %c0_10] : memref<4x16x1xf32, #tpu.memory_space<vmem>>, vector<1x16x1xf32>
    %10 = vector.shape_cast %9 : vector<1x16x1xf32> to vector<16x1xf32>
    %c1_11 = arith.constant 1 : index
    %c0_12 = arith.constant 0 : index
    %c0_13 = arith.constant 0 : index
    %11 = vector.load %arg3[%c1_11, %c0_12, %c0_13] : memref<4x16x1xf32, #tpu.memory_space<vmem>>, vector<1x16x1xf32>
    %12 = vector.shape_cast %11 : vector<1x16x1xf32> to vector<16x1xf32>
    %c2_14 = arith.constant 2 : index
    %c0_15 = arith.constant 0 : index
    %c0_16 = arith.constant 0 : index
    %13 = vector.load %arg3[%c2_14, %c0_15, %c0_16] : memref<4x16x1xf32, #tpu.memory_space<vmem>>, vector<1x16x1xf32>
    %14 = vector.shape_cast %13 : vector<1x16x1xf32> to vector<16x1xf32>
    %c3_17 = arith.constant 3 : index
    %c0_18 = arith.constant 0 : index
    %c0_19 = arith.constant 0 : index
    %15 = vector.load %arg3[%c3_17, %c0_18, %c0_19] : memref<4x16x1xf32, #tpu.memory_space<vmem>>, vector<1x16x1xf32>
    %16 = vector.shape_cast %15 : vector<1x16x1xf32> to vector<16x1xf32>
    %c0_20 = arith.constant 0 : index
    %c0_21 = arith.constant 0 : index
    %17 = vector.load %arg1[%c0_20, %c0_21] : memref<8x512xf32, #tpu.memory_space<vmem>>, vector<8x512xf32>
    %cst = arith.constant dense<0.000000e+00> : vector<16x512xf32>
    %18 = tpu.matmul %2, %17, %cst {dimension_numbers = #tpu.dot_dimension_numbers<[1], [0], [0], [1], [0, 0, 1, 1], [], []>} : vector<16x8xf32>, vector<8x512xf32>, vector<16x512xf32> -> vector<16x512xf32>
    %19 = vector.broadcast %10 : vector<16x1xf32> to vector<16x512xf32>
    %20 = arith.addf %18, %19 : vector<16x512xf32>
    %21 = math.tanh %20 : vector<16x512xf32>
    %cst_22 = arith.constant dense<0.000000e+00> : vector<16x512xf32>
    %22 = tpu.matmul %4, %21, %cst_22 {dimension_numbers = #tpu.dot_dimension_numbers<[1], [0], [0], [1], [0, 0, 1, 1], [], []>} : vector<16x16xf32>, vector<16x512xf32>, vector<16x512xf32> -> vector<16x512xf32>
    %23 = vector.broadcast %12 : vector<16x1xf32> to vector<16x512xf32>
    %24 = arith.addf %22, %23 : vector<16x512xf32>
    %25 = math.tanh %24 : vector<16x512xf32>
    %cst_23 = arith.constant dense<0.000000e+00> : vector<16x512xf32>
    %26 = tpu.matmul %6, %25, %cst_23 {dimension_numbers = #tpu.dot_dimension_numbers<[1], [0], [0], [1], [0, 0, 1, 1], [], []>} : vector<16x16xf32>, vector<16x512xf32>, vector<16x512xf32> -> vector<16x512xf32>
    %27 = vector.broadcast %14 : vector<16x1xf32> to vector<16x512xf32>
    %28 = arith.addf %26, %27 : vector<16x512xf32>
    %29 = math.tanh %28 : vector<16x512xf32>
    %cst_24 = arith.constant dense<0.000000e+00> : vector<16x512xf32>
    %30 = tpu.matmul %8, %29, %cst_24 {dimension_numbers = #tpu.dot_dimension_numbers<[1], [0], [0], [1], [0, 0, 1, 1], [], []>} : vector<16x16xf32>, vector<16x512xf32>, vector<16x512xf32> -> vector<16x512xf32>
    %31 = vector.broadcast %16 : vector<16x1xf32> to vector<16x512xf32>
    %32 = arith.addf %30, %31 : vector<16x512xf32>
    %33 = vector.extract_strided_slice %32 {offsets = [0, 0], sizes = [1, 512], strides = [1, 1]} : vector<16x512xf32> to vector<1x512xf32>
    %c0_25 = arith.constant 0 : index
    %c0_26 = arith.constant 0 : index
    %34 = vector.load %arg4[%c0_25, %c0_26] : memref<1x512xf32, #tpu.memory_space<vmem>>, vector<1x512xf32>
    tpu.vector_store %arg4[%c0_25, %c0_26], %33 {strides = array<i32>} : memref<1x512xf32, #tpu.memory_space<vmem>>, vector<1x512xf32>,
    return
  }
  func.func @transform_0(%arg0: i32) -> (i32, i32) {
    %c0_i32 = arith.constant 0 : i32
    %c0_i32_0 = arith.constant 0 : i32
    return %c0_i32, %arg0 : i32, i32
  }
  func.func @transform_1(%arg0: i32) -> (i32, i32, i32) {
    %c0_i32 = arith.constant 0 : i32
    %c0_i32_0 = arith.constant 0 : i32
    %c0_i32_1 = arith.constant 0 : i32
    %c0_i32_2 = arith.constant 0 : i32
    return %c0_i32, %c0_i32_0, %c0_i32_1 : i32, i32, i32
  }
  func.func @transform_2(%arg0: i32) -> (i32, i32, i32) {
    %c0_i32 = arith.constant 0 : i32
    %c0_i32_0 = arith.constant 0 : i32
    %c0_i32_1 = arith.constant 0 : i32
    %c0_i32_2 = arith.constant 0 : i32
    return %c0_i32, %c0_i32_0, %c0_i32_1 : i32, i32, i32
  }
  func.func @transform_3(%arg0: i32) -> (i32, i32) {
    %c0_i32 = arith.constant 0 : i32
    %c0_i32_0 = arith.constant 0 : i32
    return %c0_i32, %arg0 : i32, i32
  }
}

</mosaic_0001>

<llo_original>
// kernel: netp_forward.1
$region0: #{netp_forward.1}
  #allocation0 [shape = 'u32[]', space=smem, size = 0x4, offset = 0x4, fixed_abs, tag = 'smem constant byte address 0x4 - core index']
  #allocation1 [shape = 'u32[72,128]{1,0:T(1,128)}', space=vmem, size = 0x9000, scoped, tag = 'internal scratch']
  %s0 = inlined_call_operand.vmem [shape: f32[8,2048], index: 0, kind: input, shape index: {}]
  %s1 = inlined_call_operand.vmem [shape: f32[4,16,16], index: 1, kind: input, shape index: {}]
  %s2 = inlined_call_operand.vmem [shape: f32[4,16,1], index: 2, kind: input, shape index: {}]
  %s3 = inlined_call_operand.hbm [shape: f32[1,2048], index: 3, kind: output, shape index: {}]
  %s4 = sld [smem:[#allocation0]]
  $region45: #{netp_forward.1} parent=0
    _
  %s6 = ssub.s32 1, %s4
  %s7 = scalar_select 0, %s6, %s4
  $region1: #{netp_forward.1} parent=0
    #allocation2 [shape = 'u8[4096]{0}', space=vmem, size = 0x1000, scoped, tag = 'output window, operand 0']
    #allocation3 [shape = 's32[2]{0}', space=sflag, size = 0x8, scoped, tag = 'scoped memory for netp_forward.1']
    %8 = vsyncpa [#allocation3], 0
    %s9 = scalar_lea.sflag [#allocation3], 1
    %10 = vsyncpa %s9, 0
    loop: start=0, step=1, limit=6
    $region2: #{netp_forward.1} parent=1 // loop_pre_header
      _
    $region3: #{netp_forward.1} parent=1 // loop_header
      %s12 = sphi 0, %s16
      %p13 = scmp.ge.s32.totalorder %s12, 6
      %s22 = sphi 0, %s24
      %s25 = sphi 0, %s22
      %s26 = sphi 0, %s25
      %s42 = sphi 0, %s26
      %s46 = sphi 0, %s46
      %s48 = sphi 0, %s46
      %s49 = sphi 0, %s48
      %s63 = sphi 0, %s49
      %s67 = sphi 0, %s67
      %s69 = sphi 0, %s67
      %s70 = sphi 0, %s69
      %s84 = sphi 0, %s70
      %s90 = sphi 0, %s92
      %s93 = sphi 0, %s90
      %s94 = sphi 0, %s93
      %s110 = sphi 0, %s94
    $region4: #{netp_forward.1} parent=1 // loop_header_branch
      %15 = sbr.rel (%p13) target = $region8
    $region5: #{netp_forward.1} parent=1 // loop_body
      %s17 = ssub.s32 %s12, 1
      %s18 = ssub.s32 %s12, 2
      %s19 = sadd.s32 %s12, 1
      %s20 = ssub.s32 %s12, %s19
      %p21 = scmp.eq.s32.totalorder %s20, 0
      %s23 = sadd.s32 %s22, 1
      %s24 = scalar_select %p21, %s22, %s23
      %p27 = pneg %p21
      %p28 = scmp.eq.s32.totalorder %s12, 3
      %p29 = por %p27, %p28
      %p30 = scmp.ne.s32.totalorder %s22, %s25
      %p31 = scmp.eq.s32.totalorder %s12, 0
      %p32 = por %p30, %p31
      %p33 = scmp.ne.s32.totalorder %s22, %s25
      %p34 = scmp.eq.s32.totalorder %s17, 3
      %p35 = por %p33, %p34
      %p36 = scmp.ne.s32.totalorder %s25, %s26
      %p37 = scmp.eq.s32.totalorder %s17, 0
      %p38 = por %p36, %p37
      %p39 = scmp.ne.s32.totalorder %s25, %s26
      %p40 = scmp.eq.s32.totalorder %s18, 3
      %p41 = por %p39, %p40
      %p43 = scmp.ne.s32.totalorder %s26, %s42
      %p44 = scmp.eq.s32.totalorder %s18, 0
      %p45 = por %p43, %p44
      %s47 = sadd.s32 %s46, 1
      %p50 = scmp.eq.s32.totalorder %s12, 3
      %p51 = scmp.ne.s32.totalorder %s46, %s48
      %p52 = scmp.eq.s32.totalorder %s12, 0
      %p53 = por %p51, %p52
      %p54 = scmp.ne.s32.totalorder %s46, %s48
      %p55 = scmp.eq.s32.totalorder %s17, 3
      %p56 = por %p54, %p55
      %p57 = scmp.ne.s32.totalorder %s48, %s49
      %p58 = scmp.eq.s32.totalorder %s17, 0
      %p59 = por %p57, %p58
      %p60 = scmp.ne.s32.totalorder %s48, %s49
      %p61 = scmp.eq.s32.totalorder %s18, 3
      %p62 = por %p60, %p61
      %p64 = scmp.ne.s32.totalorder %s49, %s63
      %p65 = scmp.eq.s32.totalorder %s18, 0
      %p66 = por %p64, %p65
      %s68 = sadd.s32 %s67, 1
      %p71 = scmp.eq.s32.totalorder %s12, 3
      %p72 = scmp.ne.s32.totalorder %s67, %s69
      %p73 = scmp.eq.s32.totalorder %s12, 0
      %p74 = por %p72, %p73
      %p75 = scmp.ne.s32.totalorder %s67, %s69
      %p76 = scmp.eq.s32.totalorder %s17, 3
      %p77 = por %p75, %p76
      %p78 = scmp.ne.s32.totalorder %s69, %s70
      %p79 = scmp.eq.s32.totalorder %s17, 0
      %p80 = por %p78, %p79
      %p81 = scmp.ne.s32.totalorder %s69, %s70
      %p82 = scmp.eq.s32.totalorder %s18, 3
      %p83 = por %p81, %p82
      %p85 = scmp.ne.s32.totalorder %s70, %s84
      %p86 = scmp.eq.s32.totalorder %s18, 0
      %p87 = por %p85, %p86
      %s88 = ssub.s32 %s12, %s19
      %p89 = scmp.eq.s32.totalorder %s88, 0
      %s91 = sadd.s32 %s90, 1
      %s92 = scalar_select %p89, %s90, %s91
      %p95 = pneg %p89
      %p96 = scmp.eq.s32.totalorder %s12, 3
      %p97 = por %p95, %p96
      %p98 = scmp.ne.s32.totalorder %s90, %s93
      %p99 = scmp.eq.s32.totalorder %s12, 0
      %p100 = por %p98, %p99
      %p101 = scmp.ne.s32.totalorder %s90, %s93
      %p102 = scmp.eq.s32.totalorder %s17, 3
      %p103 = por %p101, %p102
      %p104 = scmp.ne.s32.totalorder %s93, %s94
      %p105 = scmp.eq.s32.totalorder %s17, 0
      %p106 = por %p104, %p105
      %p107 = scmp.ne.s32.totalorder %s93, %s94
      %p108 = scmp.eq.s32.totalorder %s18, 3
      %p109 = por %p107, %p108
      %p111 = scmp.ne.s32.totalorder %s94, %s110
      %p112 = scmp.eq.s32.totalorder %s18, 0
      %p113 = por %p111, %p112
      %p114 = scmp.le.s32.totalorder 1, %s12
      %p115 = scmp.lt.s32.totalorder %s12, 5
      %p116 = pnand %p114, %p115
      %p117 = pneg %p116
      // Predicated region
      $region9: #{netp_forward.1} parent=5 // pred_check
        _
      $region10: #{netp_forward.1} parent=5 // pred_check_branch
        %119 = sbr.rel (%p116) target = $region12
      $region11: #{netp_forward.1} parent=5 // pred_region
        %s120 = ssub.s32 %s12, 1
        // Predicated region
        $region13: #{netp_forward.1} parent=11 // pred_check
          %p121 = pneg %p59
        $region14: #{netp_forward.1} parent=11 // pred_check_branch
          %123 = sbr.rel (%p121) target = $region16
        $region15: #{netp_forward.1} parent=11 // pred_region
          _
        $region16: #{netp_forward.1} parent=11 // pred_fallthru
          _
        // Predicated region
        $region17: #{netp_forward.1} parent=11 // pred_check
          %p124 = pneg %p80
        $region18: #{netp_forward.1} parent=11 // pred_check_branch
          %126 = sbr.rel (%p124) target = $region20
        $region19: #{netp_forward.1} parent=11 // pred_region
          _
        $region20: #{netp_forward.1} parent=11 // pred_fallthru
          _
      $region12: #{netp_forward.1} parent=5 // pred_fallthru
        _
      %p127 = scmp.lt.s32.totalorder %s12, 4
      // Predicated region
      $region21: #{netp_forward.1} parent=5 // pred_check
        %p128 = pneg %p127
      $region22: #{netp_forward.1} parent=5 // pred_check_branch
        %130 = sbr.rel (%p128) target = $region24
      $region23: #{netp_forward.1} parent=5 // pred_region
        // Predicated region
        $region25: #{netp_forward.1} parent=23 // pred_check
          %p131 = pneg %p32
        $region26: #{netp_forward.1} parent=23 // pred_check_branch
          %133 = sbr.rel (%p131) target = $region28
        $region27: #{netp_forward.1} parent=23 // pred_region
          %s134 = smul.u32 4, %s12
          %p135 = scmp.lt.s32.totalorder %s134, 15
          %s136 = scalar_select %p135, %s134, 15
          %s137 = smul.addr %s136, 8
          %s138 = scalar_lea.vmem %s0, %s137
          %s139 = smul.u32 4, %s12
        $region28: #{netp_forward.1} parent=23 // pred_fallthru
          _
      $region24: #{netp_forward.1} parent=5 // pred_fallthru
        _
      %p140 = scmp.le.s32.totalorder 1, %s12
      %p141 = scmp.lt.s32.totalorder %s12, 5
      %p142 = pnand %p140, %p141
      %p143 = pneg %p142
      // Predicated region
      $region29: #{netp_forward.1} parent=5 // pred_check
        _
      $region30: #{netp_forward.1} parent=5 // pred_check_branch
        %145 = sbr.rel (%p142) target = $region32
      $region31: #{netp_forward.1} parent=5 // pred_region
        %s146 = ssub.s32 %s12, 1
        %s147 = smul.u32 4, %s17
        %p148 = scmp.lt.s32.totalorder %s147, 15
        %s149 = scalar_select %p148, %s147, 15
        %s150 = smul.addr %s149, 8
        %s151 = scalar_lea.vmem %s0, %s150
        %p152 = pneg %p38
        %p153 = pneg %p35
        %p154 = pneg %p59
        %p155 = pneg %p56
        %p156 = pneg %p80
        %p157 = pneg %p77
        %p158 = pneg %p106
        %p159 = pneg %p103
        %s160 = sand.u32 %s93, 1
        %s161 = scalar_lea.sflag [#allocation3], %s160
        %s162 = sand.u32 %s93, 1
        %s163 = smul.addr %s162, 4
        %s164 = scalar_lea.vmem [#allocation2], %s163
        %s165 = smul.u32 4, %s17
        %p166 = scmp.lt.s32.totalorder %s165, 15
        %s167 = scalar_select %p166, %s165, 15
        %s168 = smul.addr %s167, 8
        %s169 = scalar_lea.vmem %s0, %s168
        %s170 = smul.u32 4, %s17
        %s171 = smul.u32 4, %s17
        %v172 = vld [vmem:[%s1] sm:$0xff]
        %v173 = vld [vmem:[%s1 + $0x8] sm:$0xff]
        %s174 = scalar_lea.vmem %s1, 16
        %v175 = vld [vmem:[%s174] sm:$0xff]
        %v176 = vld [vmem:[%s174 + $0x8] sm:$0xff]
        %s177 = scalar_lea.vmem %s1, 32
        %v178 = vld [vmem:[%s177] sm:$0xff]
        %v179 = vld [vmem:[%s177 + $0x8] sm:$0xff]
        %s180 = scalar_lea.vmem %s1, 48
        %v181 = vld [vmem:[%s180] sm:$0xff]
        %v182 = vld [vmem:[%s180 + $0x8] sm:$0xff]
        %v183 = vld [vmem:[%s2] sm:$0xff]
        %v184 = vld [vmem:[%s2 + $0x8] sm:$0xff]
        %s185 = scalar_lea.vmem %s2, 16
        %v186 = vld [vmem:[%s185] sm:$0xff]
        %v187 = vld [vmem:[%s185 + $0x8] sm:$0xff]
        %s188 = scalar_lea.vmem %s2, 32
        %v189 = vld [vmem:[%s188] sm:$0xff]
        %v190 = vld [vmem:[%s188 + $0x8] sm:$0xff]
        %s191 = scalar_lea.vmem %s2, 48
        %v192 = vld [vmem:[%s191] sm:$0xff]
        %v193 = vld [vmem:[%s191 + $0x8] sm:$0xff]
        %v194 = vld [vmem:[%s169] sm:$0xff]
        %v195 = vld [vmem:[%s169 + $0x8] sm:$0xff]
        %v196 = vld [vmem:[%s169 + $0x10] sm:$0xff]
        %v197 = vld [vmem:[%s169 + $0x18] sm:$0xff]
        %199 = vset.pattern.permute.xlu0 0
        %200 = vperm.xlu0 %199, %v183
        %v201 = vpop.permute.xlu0 %200
        %204 = vset.pattern.permute.xlu0 0
        %205 = vperm.xlu0 %204, %v184
        %v206 = vpop.permute.xlu0 %205
        %vm208 = vcmask 64512
        %v210 = vsel %vm208, %v172, 0
        %v213 = vsel %vm208, %v173, 0
        %215 = vmatpush.msra.mxu0 0.0
        %216 = vmatpush.msra.mxu0 0.0
        %217 = vmatpush.msra.mxu0 0.0
        %218 = vmatpush.msra.mxu0 0.0
        %219 = vmatpush.msra.mxu0 0.0
        %220 = vmatpush.msra.mxu0 0.0
        %221 = vmatpush.msra.mxu0 0.0
        %222 = vmatpush.msra.mxu0 0.0
        %223 = vmatpush.msra.mxu0 0.0
        %224 = vmatpush.msra.mxu0 0.0
        %225 = vmatpush.msra.mxu0 0.0
        %226 = vmatpush.msra.mxu0 0.0
        %227 = vmatpush.msra.mxu0 0.0
        %228 = vmatpush.msra.mxu0 0.0
        %229 = vmatpush.msra.mxu0 0.0
        %230 = vmatpush.msra.mxu0 %v194
        %231 = vmatmul.f32.gmra.mxu0 %v210
        %v232 = vpop.f32.mrf.mxu0
        %v233 = vadd.f32 %v201, %v232
        %234 = vmatmul.f32.gmra.mxu0 %v213
        %v235 = vpop.f32.mrf.mxu0
        %v236 = vadd.f32 %v206, %v235
        %237 = vdwg.mxu0
        %238 = vmatpush.msra.mxu0 0.0
        %239 = vmatpush.msra.mxu0 0.0
        %240 = vmatpush.msra.mxu0 0.0
        %241 = vmatpush.msra.mxu0 0.0
        %242 = vmatpush.msra.mxu0 0.0
        %243 = vmatpush.msra.mxu0 0.0
        %244 = vmatpush.msra.mxu0 0.0
        %245 = vmatpush.msra.mxu0 0.0
        %246 = vmatpush.msra.mxu0 0.0
        %247 = vmatpush.msra.mxu0 0.0
        %248 = vmatpush.msra.mxu0 0.0
        %249 = vmatpush.msra.mxu0 0.0
        %250 = vmatpush.msra.mxu0 0.0
        %251 = vmatpush.msra.mxu0 0.0
        %252 = vmatpush.msra.mxu0 0.0
        %253 = vmatpush.msra.mxu0 %v195
        %254 = vmatmul.f32.gmra.mxu0 %v210
        %v255 = vpop.f32.mrf.mxu0
        %v256 = vadd.f32 %v201, %v255
        %257 = vmatmul.f32.gmra.mxu0 %v213
        %v258 = vpop.f32.mrf.mxu0
        %v259 = vadd.f32 %v206, %v258
        %260 = vdwg.mxu0
        %261 = vmatpush.msra.mxu0 0.0
        %262 = vmatpush.msra.mxu0 0.0
        %263 = vmatpush.msra.mxu0 0.0
        %264 = vmatpush.msra.mxu0 0.0
        %265 = vmatpush.msra.mxu0 0.0
        %266 = vmatpush.msra.mxu0 0.0
        %267 = vmatpush.msra.mxu0 0.0
        %268 = vmatpush.msra.mxu0 0.0
        %269 = vmatpush.msra.mxu0 0.0
        %270 = vmatpush.msra.mxu0 0.0
        %271 = vmatpush.msra.mxu0 0.0
        %272 = vmatpush.msra.mxu0 0.0
        %273 = vmatpush.msra.mxu0 0.0
        %274 = vmatpush.msra.mxu0 0.0
        %275 = vmatpush.msra.mxu0 0.0
        %276 = vmatpush.msra.mxu0 %v196
        %277 = vmatmul.f32.gmra.mxu0 %v210
        %v278 = vpop.f32.mrf.mxu0
        %v279 = vadd.f32 %v201, %v278
        %280 = vmatmul.f32.gmra.mxu0 %v213
        %v281 = vpop.f32.mrf.mxu0
        %v282 = vadd.f32 %v206, %v281
        %283 = vdwg.mxu0
        %284 = vmatpush.msra.mxu0 0.0
        %285 = vmatpush.msra.mxu0 0.0
        %286 = vmatpush.msra.mxu0 0.0
        %287 = vmatpush.msra.mxu0 0.0
        %288 = vmatpush.msra.mxu0 0.0
        %289 = vmatpush.msra.mxu0 0.0
        %290 = vmatpush.msra.mxu0 0.0
        %291 = vmatpush.msra.mxu0 0.0
        %292 = vmatpush.msra.mxu0 0.0
        %293 = vmatpush.msra.mxu0 0.0
        %294 = vmatpush.msra.mxu0 0.0
        %295 = vmatpush.msra.mxu0 0.0
        %296 = vmatpush.msra.mxu0 0.0
        %297 = vmatpush.msra.mxu0 0.0
        %298 = vmatpush.msra.mxu0 0.0
        %299 = vmatpush.msra.mxu0 %v197
        %300 = vmatmul.f32.gmra.mxu0 %v210
        %v301 = vpop.f32.mrf.mxu0
        %v302 = vadd.f32 %v201, %v301
        %303 = vmatmul.f32.gmra.mxu0 %v213
        %v304 = vpop.f32.mrf.mxu0
        %v305 = vadd.f32 %v206, %v304
        %306 = vdwg.mxu0
        %v307 = vtanh.pop %v233
        %v308 = vtanh.pop %v256
        %v309 = vtanh.pop %v279
        %v310 = vtanh.pop %v302
        %v311 = vtanh.pop %v236
        %v312 = vtanh.pop %v259
        %v313 = vtanh.pop %v282
        %v314 = vtanh.pop %v305
        %316 = vset.pattern.permute.xlu0 0
        %317 = vperm.xlu0 %316, %v186
        %v318 = vpop.permute.xlu0 %317
        %321 = vset.pattern.permute.xlu0 0
        %322 = vperm.xlu0 %321, %v187
        %v323 = vpop.permute.xlu0 %322
        %vm325 = vcmask 130048
        %v327 = vsel %vm325, %v175, 0
        %v330 = vsel %vm325, %v176, 0
        %332 = vmatpush.msra.mxu0 0.0
        %333 = vmatpush.msra.mxu0 0.0
        %334 = vmatpush.msra.mxu0 0.0
        %335 = vmatpush.msra.mxu0 0.0
        %336 = vmatpush.msra.mxu0 0.0
        %337 = vmatpush.msra.mxu0 0.0
        %338 = vmatpush.msra.mxu0 0.0
        %339 = vmatpush.msra.mxu0 0.0
        %340 = vmatpush.msra.mxu0 0.0
        %341 = vmatpush.msra.mxu0 0.0
        %342 = vmatpush.msra.mxu0 0.0
        %343 = vmatpush.msra.mxu0 0.0
        %344 = vmatpush.msra.mxu0 0.0
        %345 = vmatpush.msra.mxu0 0.0
        %346 = vmatpush.msra.mxu0 %v311
        %347 = vmatpush.msra.mxu0 %v307
        %348 = vmatmul.f32.gmra.mxu0 %v327
        %v349 = vpop.f32.mrf.mxu0
        %v350 = vadd.f32 %v318, %v349
        %351 = vmatmul.f32.gmra.mxu0 %v330
        %v352 = vpop.f32.mrf.mxu0
        %v353 = vadd.f32 %v323, %v352
        %354 = vdwg.mxu0
        %355 = vmatpush.msra.mxu0 0.0
        %356 = vmatpush.msra.mxu0 0.0
        %357 = vmatpush.msra.mxu0 0.0
        %358 = vmatpush.msra.mxu0 0.0
        %359 = vmatpush.msra.mxu0 0.0
        %360 = vmatpush.msra.mxu0 0.0
        %361 = vmatpush.msra.mxu0 0.0
        %362 = vmatpush.msra.mxu0 0.0
        %363 = vmatpush.msra.mxu0 0.0
        %364 = vmatpush.msra.mxu0 0.0
        %365 = vmatpush.msra.mxu0 0.0
        %366 = vmatpush.msra.mxu0 0.0
        %367 = vmatpush.msra.mxu0 0.0
        %368 = vmatpush.msra.mxu0 0.0
        %369 = vmatpush.msra.mxu0 %v312
        %370 = vmatpush.msra.mxu0 %v308
        %371 = vmatmul.f32.gmra.mxu0 %v327
        %v372 = vpop.f32.mrf.mxu0
        %v373 = vadd.f32 %v318, %v372
        %374 = vmatmul.f32.gmra.mxu0 %v330
        %v375 = vpop.f32.mrf.mxu0
        %v376 = vadd.f32 %v323, %v375
        %377 = vdwg.mxu0
        %378 = vmatpush.msra.mxu0 0.0
        %379 = vmatpush.msra.mxu0 0.0
        %380 = vmatpush.msra.mxu0 0.0
        %381 = vmatpush.msra.mxu0 0.0
        %382 = vmatpush.msra.mxu0 0.0
        %383 = vmatpush.msra.mxu0 0.0
        %384 = vmatpush.msra.mxu0 0.0
        %385 = vmatpush.msra.mxu0 0.0
        %386 = vmatpush.msra.mxu0 0.0
        %387 = vmatpush.msra.mxu0 0.0
        %388 = vmatpush.msra.mxu0 0.0
        %389 = vmatpush.msra.mxu0 0.0
        %390 = vmatpush.msra.mxu0 0.0
        %391 = vmatpush.msra.mxu0 0.0
        %392 = vmatpush.msra.mxu0 %v313
        %393 = vmatpush.msra.mxu0 %v309
        %394 = vmatmul.f32.gmra.mxu0 %v327
        %v395 = vpop.f32.mrf.mxu0
        %v396 = vadd.f32 %v318, %v395
        %397 = vmatmul.f32.gmra.mxu0 %v330
        %v398 = vpop.f32.mrf.mxu0
        %v399 = vadd.f32 %v323, %v398
        %400 = vdwg.mxu0
        %401 = vmatpush.msra.mxu0 0.0
        %402 = vmatpush.msra.mxu0 0.0
        %403 = vmatpush.msra.mxu0 0.0
        %404 = vmatpush.msra.mxu0 0.0
        %405 = vmatpush.msra.mxu0 0.0
        %406 = vmatpush.msra.mxu0 0.0
        %407 = vmatpush.msra.mxu0 0.0
        %408 = vmatpush.msra.mxu0 0.0
        %409 = vmatpush.msra.mxu0 0.0
        %410 = vmatpush.msra.mxu0 0.0
        %411 = vmatpush.msra.mxu0 0.0
        %412 = vmatpush.msra.mxu0 0.0
        %413 = vmatpush.msra.mxu0 0.0
        %414 = vmatpush.msra.mxu0 0.0
        %415 = vmatpush.msra.mxu0 %v314
        %416 = vmatpush.msra.mxu0 %v310
        %417 = vmatmul.f32.gmra.mxu0 %v327
        %v418 = vpop.f32.mrf.mxu0
        %v419 = vadd.f32 %v318, %v418
        %420 = vmatmul.f32.gmra.mxu0 %v330
        %v421 = vpop.f32.mrf.mxu0
        %v422 = vadd.f32 %v323, %v421
        %423 = vdwg.mxu0
        %v424 = vtanh.pop %v350
        %v425 = vtanh.pop %v373
        %v426 = vtanh.pop %v396
        %v427 = vtanh.pop %v419
        %v428 = vtanh.pop %v353
        %v429 = vtanh.pop %v376
        %v430 = vtanh.pop %v399
        %v431 = vtanh.pop %v422
        %433 = vset.pattern.permute.xlu0 0
        %434 = vperm.xlu0 %433, %v189
        %v435 = vpop.permute.xlu0 %434
        %438 = vset.pattern.permute.xlu0 0
        %439 = vperm.xlu0 %438, %v190
        %v440 = vpop.permute.xlu0 %439
        %v443 = vsel %vm325, %v178, 0
        %v446 = vsel %vm325, %v179, 0
        %448 = vmatpush.msra.mxu0 0.0
        %449 = vmatpush.msra.mxu0 0.0
        %450 = vmatpush.msra.mxu0 0.0
        %451 = vmatpush.msra.mxu0 0.0
        %452 = vmatpush.msra.mxu0 0.0
        %453 = vmatpush.msra.mxu0 0.0
        %454 = vmatpush.msra.mxu0 0.0
        %455 = vmatpush.msra.mxu0 0.0
        %456 = vmatpush.msra.mxu0 0.0
        %457 = vmatpush.msra.mxu0 0.0
        %458 = vmatpush.msra.mxu0 0.0
        %459 = vmatpush.msra.mxu0 0.0
        %460 = vmatpush.msra.mxu0 0.0
        %461 = vmatpush.msra.mxu0 0.0
        %462 = vmatpush.msra.mxu0 %v428
        %463 = vmatpush.msra.mxu0 %v424
        %464 = vmatmul.f32.gmra.mxu0 %v443
        %v465 = vpop.f32.mrf.mxu0
        %v466 = vadd.f32 %v435, %v465
        %467 = vmatmul.f32.gmra.mxu0 %v446
        %v468 = vpop.f32.mrf.mxu0
        %v469 = vadd.f32 %v440, %v468
        %470 = vdwg.mxu0
        %471 = vmatpush.msra.mxu0 0.0
        %472 = vmatpush.msra.mxu0 0.0
        %473 = vmatpush.msra.mxu0 0.0
        %474 = vmatpush.msra.mxu0 0.0
        %475 = vmatpush.msra.mxu0 0.0
        %476 = vmatpush.msra.mxu0 0.0
        %477 = vmatpush.msra.mxu0 0.0
        %478 = vmatpush.msra.mxu0 0.0
        %479 = vmatpush.msra.mxu0 0.0
        %480 = vmatpush.msra.mxu0 0.0
        %481 = vmatpush.msra.mxu0 0.0
        %482 = vmatpush.msra.mxu0 0.0
        %483 = vmatpush.msra.mxu0 0.0
        %484 = vmatpush.msra.mxu0 0.0
        %485 = vmatpush.msra.mxu0 %v429
        %486 = vmatpush.msra.mxu0 %v425
        %487 = vmatmul.f32.gmra.mxu0 %v443
        %v488 = vpop.f32.mrf.mxu0
        %v489 = vadd.f32 %v435, %v488
        %490 = vmatmul.f32.gmra.mxu0 %v446
        %v491 = vpop.f32.mrf.mxu0
        %v492 = vadd.f32 %v440, %v491
        %493 = vdwg.mxu0
        %494 = vmatpush.msra.mxu0 0.0
        %495 = vmatpush.msra.mxu0 0.0
        %496 = vmatpush.msra.mxu0 0.0
        %497 = vmatpush.msra.mxu0 0.0
        %498 = vmatpush.msra.mxu0 0.0
        %499 = vmatpush.msra.mxu0 0.0
        %500 = vmatpush.msra.mxu0 0.0
        %501 = vmatpush.msra.mxu0 0.0
        %502 = vmatpush.msra.mxu0 0.0
        %503 = vmatpush.msra.mxu0 0.0
        %504 = vmatpush.msra.mxu0 0.0
        %505 = vmatpush.msra.mxu0 0.0
        %506 = vmatpush.msra.mxu0 0.0
        %507 = vmatpush.msra.mxu0 0.0
        %508 = vmatpush.msra.mxu0 %v430
        %509 = vmatpush.msra.mxu0 %v426
        %510 = vmatmul.f32.gmra.mxu0 %v443
        %v511 = vpop.f32.mrf.mxu0
        %v512 = vadd.f32 %v435, %v511
        %513 = vmatmul.f32.gmra.mxu0 %v446
        %v514 = vpop.f32.mrf.mxu0
        %v515 = vadd.f32 %v440, %v514
        %516 = vdwg.mxu0
        %517 = vmatpush.msra.mxu0 0.0
        %518 = vmatpush.msra.mxu0 0.0
        %519 = vmatpush.msra.mxu0 0.0
        %520 = vmatpush.msra.mxu0 0.0
        %521 = vmatpush.msra.mxu0 0.0
        %522 = vmatpush.msra.mxu0 0.0
        %523 = vmatpush.msra.mxu0 0.0
        %524 = vmatpush.msra.mxu0 0.0
        %525 = vmatpush.msra.mxu0 0.0
        %526 = vmatpush.msra.mxu0 0.0
        %527 = vmatpush.msra.mxu0 0.0
        %528 = vmatpush.msra.mxu0 0.0
        %529 = vmatpush.msra.mxu0 0.0
        %530 = vmatpush.msra.mxu0 0.0
        %531 = vmatpush.msra.mxu0 %v431
        %532 = vmatpush.msra.mxu0 %v427
        %533 = vmatmul.f32.gmra.mxu0 %v443
        %v534 = vpop.f32.mrf.mxu0
        %v535 = vadd.f32 %v435, %v534
        %536 = vmatmul.f32.gmra.mxu0 %v446
        %v537 = vpop.f32.mrf.mxu0
        %v538 = vadd.f32 %v440, %v537
        %539 = vdwg.mxu0
        %v540 = vtanh.pop %v466
        %v541 = vtanh.pop %v489
        %v542 = vtanh.pop %v512
        %v543 = vtanh.pop %v535
        %v544 = vtanh.pop %v469
        %v545 = vtanh.pop %v492
        %v546 = vtanh.pop %v515
        %v547 = vtanh.pop %v538
        %549 = vset.pattern.permute.xlu0 0
        %550 = vperm.xlu0 %549, %v192
        %v551 = vpop.permute.xlu0 %550
        %554 = vset.pattern.permute.xlu0 0
        %555 = vperm.xlu0 %554, %v193
        %v556 = vpop.permute.xlu0 %555
        %v558 = vsel %vm325, %v181, 0
        %v561 = vsel %vm325, %v182, 0
        %563 = vmatpush.msra.mxu0 0.0
        %564 = vmatpush.msra.mxu0 0.0
        %565 = vmatpush.msra.mxu0 0.0
        %566 = vmatpush.msra.mxu0 0.0
        %567 = vmatpush.msra.mxu0 0.0
        %568 = vmatpush.msra.mxu0 0.0
        %569 = vmatpush.msra.mxu0 0.0
        %570 = vmatpush.msra.mxu0 0.0
        %571 = vmatpush.msra.mxu0 0.0
        %572 = vmatpush.msra.mxu0 0.0
        %573 = vmatpush.msra.mxu0 0.0
        %574 = vmatpush.msra.mxu0 0.0
        %575 = vmatpush.msra.mxu0 0.0
        %576 = vmatpush.msra.mxu0 0.0
        %577 = vmatpush.msra.mxu0 %v544
        %578 = vmatpush.msra.mxu0 %v540
        %579 = vmatmul.f32.gmra.mxu0 %v558
        %v580 = vpop.f32.mrf.mxu0
        %v581 = vadd.f32 %v551, %v580
        %582 = vmatmul.f32.gmra.mxu0 %v561
        %v583 = vpop.f32.mrf.mxu0
        %584 = vdwg.mxu0
        %585 = vmatpush.msra.mxu0 0.0
        %586 = vmatpush.msra.mxu0 0.0
        %587 = vmatpush.msra.mxu0 0.0
        %588 = vmatpush.msra.mxu0 0.0
        %589 = vmatpush.msra.mxu0 0.0
        %590 = vmatpush.msra.mxu0 0.0
        %591 = vmatpush.msra.mxu0 0.0
        %592 = vmatpush.msra.mxu0 0.0
        %593 = vmatpush.msra.mxu0 0.0
        %594 = vmatpush.msra.mxu0 0.0
        %595 = vmatpush.msra.mxu0 0.0
        %596 = vmatpush.msra.mxu0 0.0
        %597 = vmatpush.msra.mxu0 0.0
        %598 = vmatpush.msra.mxu0 0.0
        %599 = vmatpush.msra.mxu0 %v545
        %600 = vmatpush.msra.mxu0 %v541
        %601 = vmatmul.f32.gmra.mxu0 %v558
        %v602 = vpop.f32.mrf.mxu0
        %v603 = vadd.f32 %v551, %v602
        %604 = vmatmul.f32.gmra.mxu0 %v561
        %v605 = vpop.f32.mrf.mxu0
        %606 = vdwg.mxu0
        %607 = vmatpush.msra.mxu0 0.0
        %608 = vmatpush.msra.mxu0 0.0
        %609 = vmatpush.msra.mxu0 0.0
        %610 = vmatpush.msra.mxu0 0.0
        %611 = vmatpush.msra.mxu0 0.0
        %612 = vmatpush.msra.mxu0 0.0
        %613 = vmatpush.msra.mxu0 0.0
        %614 = vmatpush.msra.mxu0 0.0
        %615 = vmatpush.msra.mxu0 0.0
        %616 = vmatpush.msra.mxu0 0.0
        %617 = vmatpush.msra.mxu0 0.0
        %618 = vmatpush.msra.mxu0 0.0
        %619 = vmatpush.msra.mxu0 0.0
        %620 = vmatpush.msra.mxu0 0.0
        %621 = vmatpush.msra.mxu0 %v546
        %622 = vmatpush.msra.mxu0 %v542
        %623 = vmatmul.f32.gmra.mxu0 %v558
        %v624 = vpop.f32.mrf.mxu0
        %v625 = vadd.f32 %v551, %v624
        %626 = vmatmul.f32.gmra.mxu0 %v561
        %v627 = vpop.f32.mrf.mxu0
        %628 = vdwg.mxu0
        %629 = vmatpush.msra.mxu0 0.0
        %630 = vmatpush.msra.mxu0 0.0
        %631 = vmatpush.msra.mxu0 0.0
        %632 = vmatpush.msra.mxu0 0.0
        %633 = vmatpush.msra.mxu0 0.0
        %634 = vmatpush.msra.mxu0 0.0
        %635 = vmatpush.msra.mxu0 0.0
        %636 = vmatpush.msra.mxu0 0.0
        %637 = vmatpush.msra.mxu0 0.0
        %638 = vmatpush.msra.mxu0 0.0
        %639 = vmatpush.msra.mxu0 0.0
        %640 = vmatpush.msra.mxu0 0.0
        %641 = vmatpush.msra.mxu0 0.0
        %642 = vmatpush.msra.mxu0 0.0
        %643 = vmatpush.msra.mxu0 %v547
        %644 = vmatpush.msra.mxu0 %v543
        %645 = vmatmul.f32.gmra.mxu0 %v558
        %v646 = vpop.f32.mrf.mxu0
        %v647 = vadd.f32 %v551, %v646
        %648 = vmatmul.f32.gmra.mxu0 %v561
        %v649 = vpop.f32.mrf.mxu0
        %650 = vdwg.mxu0
        %v655 = vrot.slane %v603, 7
        %v656 = vrot.slane %v625, 6
        %v657 = vrot.slane %v647, 5
        %vm658 = vcmask 1040384
        %v659 = vsel %vm658, %v581, %v655
        %vm660 = vcmask 1042434
        %v661 = vsel %vm660, %v656, %v657
        %vm662 = vcmask 1041408
        %v663 = vsel %vm662, %v659, %v661
        %v665 = vlaneseq
        %vm666 = vcmp.ge.s32.totalorder %v665, 0
        %vm667 = vcmp.lt.s32.totalorder %v665, 512
        %vm668 = vmand %vm666, %vm667
        %669 = vst.msk [vmem:[%s164] sm:$0xf] %vm668, %v663
        %s670 = sand.u32 %s93, 1
        %s671 = scalar_lea.sflag [#allocation3], %s670
        %s672 = sand.u32 %s93, 1
        %s673 = smul.addr %s672, 4
        %s674 = scalar_lea.vmem [#allocation2], %s673
        // Predicated region
        $region33: #{netp_forward.1} parent=31 // pred_check
          %p675 = pneg %p103
        $region34: #{netp_forward.1} parent=31 // pred_check_branch
          %677 = sbr.rel (%p675) target = $region36
        $region35: #{netp_forward.1} parent=31 // pred_region
          %s678 = smul.u32 4, %s17
          %680 = vsyncadd %s671, 0
          %s681 = scalar_lea.hbm %s3, %s678
          %s683 = sshll.u32 %s674, 4
          %s684 = int_to_ptr.vmem [resolvable:$true] %s683
          %s685 = sshll.u32 %s681, 4
          %s686 = int_to_ptr.hbm [resolvable:$true] %s685
          %688 = dma.vmem_to_hbm [thread:$0]  %s684, 64, %s686, %s671
        $region36: #{netp_forward.1} parent=31 // pred_fallthru
          _
      $region32: #{netp_forward.1} parent=5 // pred_fallthru
        _
      %p689 = scmp.le.s32.totalorder 2, %s12
      // Predicated region
      $region37: #{netp_forward.1} parent=5 // pred_check
        %p690 = pneg %p689
      $region38: #{netp_forward.1} parent=5 // pred_check_branch
        %692 = sbr.rel (%p690) target = $region40
      $region39: #{netp_forward.1} parent=5 // pred_region
        %s693 = ssub.s32 %s12, 2
        // Predicated region
        $region41: #{netp_forward.1} parent=39 // pred_check
          %p694 = pneg %p109
        $region42: #{netp_forward.1} parent=39 // pred_check_branch
          %696 = sbr.rel (%p694) target = $region44
        $region43: #{netp_forward.1} parent=39 // pred_region
          %s697 = sand.u32 %s94, 1
          %s698 = scalar_lea.sflag [#allocation3], %s697
          %s699 = sand.u32 %s94, 1
          %s700 = smul.addr %s699, 4
          %s701 = scalar_lea.vmem [#allocation2], %s700
          %703 = dma.done %s698, 64
        $region44: #{netp_forward.1} parent=39 // pred_fallthru
          _
      $region40: #{netp_forward.1} parent=5 // pred_fallthru
        _
    $region6: #{netp_forward.1} parent=1 // loop_footer
      %s16 = sadd.s32 1, %s12
    $region7: #{netp_forward.1} parent=1 // loop_footer_branch
      %11 = sbr.rel target = $region3
    $region8: #{netp_forward.1} parent=1 // loop_exit
      _
    %704 = vsyncpa [#allocation3], 1
    %s705 = scalar_lea.sflag [#allocation3], 1
    %706 = vsyncpa %s705, 1

</llo_original>
